<compile_context>
chip_gen: v7x
topology: tpu7x:2x2x1
jax: 0.10.0
libtpu: 0.0.40
codegen_flags: <defaults>
</compile_context>

<pallas_src>
import functools
import math

import jax
import jax.numpy as jnp
from jax.experimental import pallas as pl
from jax.experimental.pallas import tpu as pltpu

LN_EPS = 1e-5


def _round_up(x, m):
    return ((x + m - 1) // m) * m


def _layer_norm(x, gamma, beta):
    mu = jnp.mean(x, axis=-1, keepdims=True)
    var = jnp.mean((x - mu) ** 2, axis=-1, keepdims=True)
    return (x - mu) * jax.lax.rsqrt(var + LN_EPS) * gamma + beta


def _gelu(x, approximate):
    if approximate:
        # tanh approximation -> EUP transcendental (separate VLIW slot).
        c = math.sqrt(2.0 / math.pi)
        return 0.5 * x * (1.0 + jnp.tanh(c * (x + 0.044715 * x * x * x)))
    # exact erf GELU (matches torch.nn.GELU default numerics).
    return 0.5 * x * (1.0 + jax.lax.erf(x * (1.0 / math.sqrt(2.0))))


def mlp_bridge_kernel(x_ref, gv_ref, bv_ref, w1_ref, b1_ref,
                      gh_ref, bh_ref, w2_ref, b2_ref, o_ref, g_ref,
                      *, approximate_gelu):
    j = pl.program_id(1)

    # The front half (LN -> Linear1 -> LN -> GELU) depends only on the row
    # tile i: compute it once at the first Dt tile into a VMEM scratch that
    # carries across the "arbitrary" j axis.
    @pl.when(j == 0)
    def _():
        x = x_ref[...].astype(jnp.float32)
        xn = _layer_norm(x, gv_ref[...].astype(jnp.float32),
                         bv_ref[...].astype(jnp.float32))
        # MXU fed in the weights' native (bf16) dtype; f32 accumulation.
        h = jnp.dot(xn.astype(w1_ref.dtype), w1_ref[...],
                    preferred_element_type=jnp.float32)
        h = h + b1_ref[...].astype(jnp.float32)
        hn = _layer_norm(h, gh_ref[...].astype(jnp.float32),
                         bh_ref[...].astype(jnp.float32))
        g_ref[...] = _gelu(hn, approximate_gelu).astype(g_ref.dtype)

    # Linear(2*vision_width, text_width) on the current Dt tile.
    out = jnp.dot(g_ref[...], w2_ref[...], preferred_element_type=jnp.float32)
    out = out + b2_ref[...].astype(jnp.float32)
    o_ref[...] = out.astype(o_ref.dtype)


def _vmem_capacity_bytes():
    try:
        return int(pltpu.get_tpu_info().vmem_capacity_bytes)
    except Exception:
        return 64 * 2**20  # conservative fallback: v7x per-TensorCore VMEM


def mlp_bridge_forward(vision_embeds, vision_atts, params, *,
                       row_tile=512, dt_tile=1024,
                       matmul_dtype=jnp.bfloat16, out_dtype=None,
                       approximate_gelu=False):
    """vision_embeds: [B, S, Dv] -> (v2t_feats [B, S, Dt], vision_atts)."""
    B, S, Dv = vision_embeds.shape
    H = params["w1"].shape[1]
    Dt = params["w2"].shape[1]
    M = B * S
    out_dtype = vision_embeds.dtype if out_dtype is None else out_dtype
    mm_dtype = params["w1"].dtype if matmul_dtype is None else matmul_dtype

    # ---- weights in the MXU-native dtype (bf16 by default).
    w1 = params["w1"].astype(mm_dtype)
    w2 = params["w2"].astype(mm_dtype)
    b2 = params["b2"]

    # ---- lane-dense output: pad text_width to a multiple of 128 (weight-side
    # pad only; the extra columns are sliced off at the end).
    Dt_pad = _round_up(Dt, 128)
    if Dt_pad != Dt:
        w2 = jnp.pad(w2, ((0, 0), (0, Dt_pad - Dt)))
        b2 = jnp.pad(b2, ((0, Dt_pad - Dt),))

    # 1-D params presented as (1, N) slabs (lane-dense, broadcast over rows).
    gv = params["ln_v_gamma"].reshape(1, Dv)
    bv = params["ln_v_beta"].reshape(1, Dv)
    b1 = params["b1"].reshape(1, H)
    gh = params["ln_h_gamma"].reshape(1, H)
    bh = params["ln_h_beta"].reshape(1, H)
    b2 = b2.reshape(1, Dt_pad)

    const_arrays = (gv, bv, w1, b1, gh, bh)
    const_bytes = sum(int(a.size) * a.dtype.itemsize for a in const_arrays)

    x_item = jnp.dtype(vision_embeds.dtype).itemsize
    o_item = jnp.dtype(out_dtype).itemsize
    w_item = jnp.dtype(mm_dtype).itemsize
    b2_item = b2.dtype.itemsize

    # No wrapper-side pad of the activations along M: the last row tile may
    # run past M; Pallas masks the out-of-bounds output writes and the garbage
    # rows it reads never reach HBM.
    rt = max(8, _round_up(min(row_tile, M), 8))
    tn = min(Dt_pad, max(128, _round_up(min(dt_tile, Dt_pad), 128)))

    vmem_cap = _vmem_capacity_bytes()          # 128 MiB v5e/v6e, 64 MiB v7x
    budget = int(0.80 * vmem_cap)              # headroom for Mosaic scratch

    def _est(rt_, tn_):
        n_dt = -(-Dt_pad // tn_)
        w2_bufs = 1 if n_dt == 1 else 2
        w2_bytes = H * tn_ * w_item * w2_bufs + tn_ * b2_item * w2_bufs
        io = 2 * rt_ * Dv * x_item + 2 * rt_ * tn_ * o_item
        scratch = rt_ * H * w_item                      # GELU activations
        tmps = rt_ * (Dv + 2 * H + tn_) * 4             # f32 temporaries
        return const_bytes + w2_bytes + io + scratch + tmps

    # Shrink tiles until the working set fits the per-core VMEM budget.
    while _est(rt, tn) > budget:
        if tn > 512:
            tn = max(512, (tn // 2) // 128 * 128)
        elif rt > 128:
            rt = max(128, _round_up(rt // 2, 8))
        elif tn > 128:
            tn = max(128, (tn // 2) // 128 * 128)
        elif rt > 8:
            rt = max(8, _round_up(rt // 2, 8))
        else:
            break

    grid_m = -(-M // rt)
    grid_n = -(-Dt_pad // tn)
    est = _est(rt, tn)
    # Never below the working set; never above the headroom'd physical budget.
    vmem_limit = int(min(budget, max(32 * 2**20, est + est // 2)))
    # TODO(synk): on v7x (2 TensorCores), when M fits a single row tile, split
    # rt in half so the "parallel" row axis can shard across both cores.

    x2d = vision_embeds.reshape(M, Dv)

    def _const_spec(shape):
        # Grid-invariant: DMA'd once, single-buffered (no second VMEM copy).
        return pl.BlockSpec(shape, lambda i, j: (0, 0),
                            pipeline_mode=pl.Buffered(1))

    def _dt_spec(shape):
        # Varies with the Dt tile only; single-buffer when there is a single
        # Dt tile, otherwise keep default double-buffering to overlap the DMA.
        if grid_n == 1:
            return pl.BlockSpec(shape, lambda i, j: (0, j),
                                pipeline_mode=pl.Buffered(1))
        return pl.BlockSpec(shape, lambda i, j: (0, j))

    cost = pl.CostEstimate(
        flops=2 * M * (Dv * H + H * Dt_pad),
        transcendentals=M * H,
        bytes_accessed=int(M * Dv * x_item + const_bytes
                           + (H + 1) * Dt_pad * w_item
                           + M * Dt_pad * o_item),
    )

    out2d = pl.pallas_call(
        functools.partial(mlp_bridge_kernel, approximate_gelu=approximate_gelu),
        out_shape=jax.ShapeDtypeStruct((M, Dt_pad), out_dtype),
        grid_spec=pltpu.PrefetchScalarGridSpec(
            num_scalar_prefetch=0,
            grid=(grid_m, grid_n),
            in_specs=[
                pl.BlockSpec((rt, Dv), lambda i, j: (i, 0)),   # x row tile
                _const_spec((1, Dv)), _const_spec((1, Dv)),    # ln_vision gamma/beta
                _const_spec((Dv, H)), _const_spec((1, H)),     # Linear1 W/b
                _const_spec((1, H)), _const_spec((1, H)),      # LayerNorm(H) gamma/beta
                _dt_spec((H, tn)), _dt_spec((1, tn)),          # Linear2 W/b tiles
            ],
            out_specs=pl.BlockSpec((rt, tn), lambda i, j: (i, j)),
            scratch_shapes=[pltpu.VMEM((rt, H), mm_dtype)],    # GELU activations
        ),
        compiler_params=pltpu.CompilerParams(
            dimension_semantics=("parallel", "arbitrary"),
            vmem_limit_bytes=vmem_limit,
        ),
        cost_estimate=cost,
    )(x2d, gv, bv, w1, b1, gh, bh, w2, b2)

    v2t_feats = out2d[:, :Dt].reshape(B, S, Dt)
    return v2t_feats, vision_atts


def init_params(key, vision_width, text_width, dtype=jnp.float32):
    """Deterministic synthetic parameters matching the torch module shapes."""
    H = vision_width * 2
    ks = jax.random.split(key, 4)
    lim1 = 1.0 / math.sqrt(vision_width)
    lim2 = 1.0 / math.sqrt(H)
    return {
        "ln_v_gamma": jnp.ones((vision_width,), dtype),
        "ln_v_beta": jnp.zeros((vision_width,), dtype),
        "w1": jax.random.uniform(ks[0], (vision_width, H), dtype, -lim1, lim1),
        "b1": jax.random.uniform(ks[1], (H,), dtype, -lim1, lim1),
        "ln_h_gamma": jnp.ones((H,), dtype),
        "ln_h_beta": jnp.zeros((H,), dtype),
        "w2": jax.random.uniform(ks[2], (H, text_width), dtype, -lim2, lim2),
        "b2": jax.random.uniform(ks[3], (text_width,), dtype, -lim2, lim2),
    }


def _reference(vision_embeds, params, mm_dtype=jnp.bfloat16):
    """Pure-JAX reference mirroring the kernel's mixed-precision policy."""
    x = vision_embeds.astype(jnp.float32)
    x = _layer_norm(x, params["ln_v_gamma"].astype(jnp.float32),
                    params["ln_v_beta"].astype(jnp.float32))
    h = jnp.dot(x.astype(mm_dtype), params["w1"].astype(mm_dtype),
                preferred_element_type=jnp.float32)
    h = h + params["b1"].astype(jnp.float32)
    h = _layer_norm(h, params["ln_h_gamma"].astype(jnp.float32),
                    params["ln_h_beta"].astype(jnp.float32))
    g = _gelu(h, approximate=False)
    out = jnp.dot(g.astype(mm_dtype), params["w2"].astype(mm_dtype),
                  preferred_element_type=jnp.float32)
    out = out + params["b2"].astype(jnp.float32)
    return out.astype(vision_embeds.dtype)


if __name__ == "__main__":
    B, S, Dv, Dt = 2, 8, 32, 48

    key = jax.random.PRNGKey(0)
    k_x, k_p = jax.random.split(key)

    vision_embeds = jax.random.normal(k_x, (B, S, Dv), jnp.float32)
    vision_atts = jnp.ones((B, S), jnp.int32)
    params = init_params(k_p, Dv, Dt)

    v2t_feats, atts_out = mlp_bridge_forward(vision_embeds, vision_atts, params)
    v2t_feats = jax.block_until_ready(v2t_feats)

    ref = _reference(vision_embeds, params)
    assert v2t_feats.shape == (B, S, Dt)
    assert atts_out.shape == (B, S)
    # bf16 matmuls in the kernel: compare against a reference that mirrors the
    # same mixed-precision policy (expected mixed-precision deviation, not a bug).
    assert jnp.allclose(v2t_feats, ref, atol=2e-2, rtol=2e-2), "mismatch vs reference"

    print("KERNEL_OK")
</pallas_src>

<mosaic_0001>
module attributes {stable_mosaic.version = 11 : i64} {
  func.func @mlp_bridge_kernel(%arg0: i32, %arg1: i32, %arg2: memref<16x32xf32, #tpu.memory_space<vmem>>, %arg3: memref<1x32xf32, #tpu.memory_space<vmem>>, %arg4: memref<1x32xf32, #tpu.memory_space<vmem>>, %arg5: memref<32x64xbf16, #tpu.memory_space<vmem>>, %arg6: memref<1x64xf32, #tpu.memory_space<vmem>>, %arg7: memref<1x64xf32, #tpu.memory_space<vmem>>, %arg8: memref<1x64xf32, #tpu.memory_space<vmem>>, %arg9: memref<64x128xbf16, #tpu.memory_space<vmem>>, %arg10: memref<1x128xf32, #tpu.memory_space<vmem>>, %arg11: memref<16x128xf32, #tpu.memory_space<vmem>>, %arg12: memref<16x64xbf16, #tpu.memory_space<vmem>>) attributes {dimension_semantics = [#tpu.dimension_semantics<parallel>, #tpu.dimension_semantics<arbitrary>], iteration_bounds = array<i64: 1, 1>, scalar_prefetch = 0 : i64, scratch_operands = 1 : i64, tpu.core_type = #tpu.core_type<tc>, window_params = [{transform_indices = @transform_0, window_bounds = array<i64: 16, 32>}, {pipeline_mode = #tpu.pipeline_mode<synchronous>, transform_indices = @transform_1, window_bounds = array<i64: 1, 32>}, {pipeline_mode = #tpu.pipeline_mode<synchronous>, transform_indices = @transform_2, window_bounds = array<i64: 1, 32>}, {pipeline_mode = #tpu.pipeline_mode<synchronous>, transform_indices = @transform_3, window_bounds = array<i64: 32, 64>}, {pipeline_mode = #tpu.pipeline_mode<synchronous>, transform_indices = @transform_4, window_bounds = array<i64: 1, 64>}, {pipeline_mode = #tpu.pipeline_mode<synchronous>, transform_indices = @transform_5, window_bounds = array<i64: 1, 64>}, {pipeline_mode = #tpu.pipeline_mode<synchronous>, transform_indices = @transform_6, window_bounds = array<i64: 1, 64>}, {pipeline_mode = #tpu.pipeline_mode<synchronous>, transform_indices = @transform_7, window_bounds = array<i64: 64, 128>}, {pipeline_mode = #tpu.pipeline_mode<synchronous>, transform_indices = @transform_8, window_bounds = array<i64: 1, 128>}, {transform_indices = @transform_9, window_bounds = array<i64: 16, 128>}]} {
    %c0_i32 = arith.constant 0 : i32
    %0 = arith.cmpi eq, %arg1, %c0_i32 : i32
    %1 = arith.extui %0 : i1 to i32
    %c0_i32_0 = arith.constant 0 : i32
    %2 = arith.cmpi ne, %1, %c0_i32_0 : i32
    scf.if %2 {
      %c0_8 = arith.constant 0 : index
      %c0_9 = arith.constant 0 : index
      %10 = vector.load %arg2[%c0_8, %c0_9] : memref<16x32xf32, #tpu.memory_space<vmem>>, vector<16x32xf32>
      %c0_10 = arith.constant 0 : index
      %c0_11 = arith.constant 0 : index
      %11 = vector.load %arg3[%c0_10, %c0_11] : memref<1x32xf32, #tpu.memory_space<vmem>>, vector<1x32xf32>
      %c0_12 = arith.constant 0 : index
      %c0_13 = arith.constant 0 : index
      %12 = vector.load %arg4[%c0_12, %c0_13] : memref<1x32xf32, #tpu.memory_space<vmem>>, vector<1x32xf32>
      %cst_14 = arith.constant dense<0.000000e+00> : vector<16xf32>
      %13 = vector.multi_reduction <add>, %10, %cst_14 [1] : vector<16x32xf32> to vector<16xf32>
      %14 = vector.shape_cast %13 : vector<16xf32> to vector<16x1xf32>
      %cst_15 = arith.constant 3.200000e+01 : f32
      %15 = vector.broadcast %cst_15 : f32 to vector<16x1xf32>
      %16 = arith.divf %14, %15 : vector<16x1xf32>
      %17 = vector.broadcast %16 : vector<16x1xf32> to vector<16x32xf32>
      %18 = arith.subf %10, %17 : vector<16x32xf32>
      %19 = arith.mulf %18, %18 : vector<16x32xf32>
      %cst_16 = arith.constant dense<0.000000e+00> : vector<16xf32>
      %20 = vector.multi_reduction <add>, %19, %cst_16 [1] : vector<16x32xf32> to vector<16xf32>
      %21 = vector.shape_cast %20 : vector<16xf32> to vector<16x1xf32>
      %cst_17 = arith.constant 3.200000e+01 : f32
      %22 = vector.broadcast %cst_17 : f32 to vector<16x1xf32>
      %23 = arith.divf %21, %22 : vector<16x1xf32>
      %24 = vector.broadcast %16 : vector<16x1xf32> to vector<16x32xf32>
      %25 = arith.subf %10, %24 : vector<16x32xf32>
      %cst_18 = arith.constant 9.99999974E-6 : f32
      %26 = vector.broadcast %cst_18 : f32 to vector<16x1xf32>
      %27 = arith.addf %23, %26 : vector<16x1xf32>
      %28 = math.rsqrt %27 : vector<16x1xf32>
      %29 = vector.broadcast %28 : vector<16x1xf32> to vector<16x32xf32>
      %30 = arith.mulf %25, %29 : vector<16x32xf32>
      %31 = vector.broadcast %11 : vector<1x32xf32> to vector<16x32xf32>
      %32 = arith.mulf %30, %31 : vector<16x32xf32>
      %33 = vector.broadcast %12 : vector<1x32xf32> to vector<16x32xf32>
      %34 = arith.addf %32, %33 : vector<16x32xf32>
      %35 = arith.truncf %34 : vector<16x32xf32> to vector<16x32xbf16>
      %c0_19 = arith.constant 0 : index
      %c0_20 = arith.constant 0 : index
      %36 = vector.load %arg5[%c0_19, %c0_20] : memref<32x64xbf16, #tpu.memory_space<vmem>>, vector<32x64xbf16>
      %cst_21 = arith.constant dense<0.000000e+00> : vector<16x64xf32>
      %37 = tpu.matmul %35, %36, %cst_21 {dimension_numbers = #tpu.dot_dimension_numbers<[1], [0], [0], [1], [0, 0, 1, 1], [], []>} : vector<16x32xbf16>, vector<32x64xbf16>, vector<16x64xf32> -> vector<16x64xf32>
      %c0_22 = arith.constant 0 : index
      %c0_23 = arith.constant 0 : index
      %38 = vector.load %arg6[%c0_22, %c0_23] : memref<1x64xf32, #tpu.memory_space<vmem>>, vector<1x64xf32>
      %39 = vector.broadcast %38 : vector<1x64xf32> to vector<16x64xf32>
      %40 = arith.addf %37, %39 : vector<16x64xf32>
      %c0_24 = arith.constant 0 : index
      %c0_25 = arith.constant 0 : index
      %41 = vector.load %arg7[%c0_24, %c0_25] : memref<1x64xf32, #tpu.memory_space<vmem>>, vector<1x64xf32>
      %c0_26 = arith.constant 0 : index
      %c0_27 = arith.constant 0 : index
      %42 = vector.load %arg8[%c0_26, %c0_27] : memref<1x64xf32, #tpu.memory_space<vmem>>, vector<1x64xf32>
      %cst_28 = arith.constant dense<0.000000e+00> : vector<16xf32>
      %43 = vector.multi_reduction <add>, %40, %cst_28 [1] : vector<16x64xf32> to vector<16xf32>
      %44 = vector.shape_cast %43 : vector<16xf32> to vector<16x1xf32>
      %cst_29 = arith.constant 6.400000e+01 : f32
      %45 = vector.broadcast %cst_29 : f32 to vector<16x1xf32>
      %46 = arith.divf %44, %45 : vector<16x1xf32>
      %47 = vector.broadcast %46 : vector<16x1xf32> to vector<16x64xf32>
      %48 = arith.subf %40, %47 : vector<16x64xf32>
      %49 = arith.mulf %48, %48 : vector<16x64xf32>
      %cst_30 = arith.constant dense<0.000000e+00> : vector<16xf32>
      %50 = vector.multi_reduction <add>, %49, %cst_30 [1] : vector<16x64xf32> to vector<16xf32>
      %51 = vector.shape_cast %50 : vector<16xf32> to vector<16x1xf32>
      %cst_31 = arith.constant 6.400000e+01 : f32
      %52 = vector.broadcast %cst_31 : f32 to vector<16x1xf32>
      %53 = arith.divf %51, %52 : vector<16x1xf32>
      %54 = vector.broadcast %46 : vector<16x1xf32> to vector<16x64xf32>
      %55 = arith.subf %40, %54 : vector<16x64xf32>
      %cst_32 = arith.constant 9.99999974E-6 : f32
      %56 = vector.broadcast %cst_32 : f32 to vector<16x1xf32>
      %57 = arith.addf %53, %56 : vector<16x1xf32>
      %58 = math.rsqrt %57 : vector<16x1xf32>
      %59 = vector.broadcast %58 : vector<16x1xf32> to vector<16x64xf32>
      %60 = arith.mulf %55, %59 : vector<16x64xf32>
      %61 = vector.broadcast %41 : vector<1x64xf32> to vector<16x64xf32>
      %62 = arith.mulf %60, %61 : vector<16x64xf32>
      %63 = vector.broadcast %42 : vector<1x64xf32> to vector<16x64xf32>
      %64 = arith.addf %62, %63 : vector<16x64xf32>
      %cst_33 = arith.constant 5.000000e-01 : f32
      %65 = vector.broadcast %cst_33 : f32 to vector<16x64xf32>
      %66 = arith.mulf %65, %64 : vector<16x64xf32>
      %cst_34 = arith.constant 0.707106769 : f32
      %67 = vector.broadcast %cst_34 : f32 to vector<16x64xf32>
      %68 = arith.mulf %64, %67 : vector<16x64xf32>
      %69 = math.erf %68 : vector<16x64xf32>
      %cst_35 = arith.constant 1.000000e+00 : f32
      %70 = vector.broadcast %cst_35 : f32 to vector<16x64xf32>
      %71 = arith.addf %70, %69 : vector<16x64xf32>
      %72 = arith.mulf %66, %71 : vector<16x64xf32>
      %73 = arith.truncf %72 : vector<16x64xf32> to vector<16x64xbf16>
      %c0_36 = arith.constant 0 : index
      %c0_37 = arith.constant 0 : index
      %74 = vector.load %arg12[%c0_36, %c0_37] : memref<16x64xbf16, #tpu.memory_space<vmem>>, vector<16x64xbf16>
      tpu.vector_store %arg12[%c0_36, %c0_37], %73 {strides = array<i32>} : memref<16x64xbf16, #tpu.memory_space<vmem>>, vector<16x64xbf16>,
    } else {
    }
    %c0 = arith.constant 0 : index
    %c0_1 = arith.constant 0 : index
    %3 = vector.load %arg12[%c0, %c0_1] : memref<16x64xbf16, #tpu.memory_space<vmem>>, vector<16x64xbf16>
    %c0_2 = arith.constant 0 : index
    %c0_3 = arith.constant 0 : index
    %4 = vector.load %arg9[%c0_2, %c0_3] : memref<64x128xbf16, #tpu.memory_space<vmem>>, vector<64x128xbf16>
    %cst = arith.constant dense<0.000000e+00> : vector<16x128xf32>
    %5 = tpu.matmul %3, %4, %cst {dimension_numbers = #tpu.dot_dimension_numbers<[1], [0], [0], [1], [0, 0, 1, 1], [], []>} : vector<16x64xbf16>, vector<64x128xbf16>, vector<16x128xf32> -> vector<16x128xf32>
    %c0_4 = arith.constant 0 : index
    %c0_5 = arith.constant 0 : index
    %6 = vector.load %arg10[%c0_4, %c0_5] : memref<1x128xf32, #tpu.memory_space<vmem>>, vector<1x128xf32>
    %7 = vector.broadcast %6 : vector<1x128xf32> to vector<16x128xf32>
    %8 = arith.addf %5, %7 : vector<16x128xf32>
    %c0_6 = arith.constant 0 : index
    %c0_7 = arith.constant 0 : index
    %9 = vector.load %arg11[%c0_6, %c0_7] : memref<16x128xf32, #tpu.memory_space<vmem>>, vector<16x128xf32>
    tpu.vector_store %arg11[%c0_6, %c0_7], %8 {strides = array<i32>} : memref<16x128xf32, #tpu.memory_space<vmem>>, vector<16x128xf32>,
    return
  }
  func.func @transform_0(%arg0: i32, %arg1: i32) -> (i32, i32) {
    %c0_i32 = arith.constant 0 : i32
    %c0_i32_0 = arith.constant 0 : i32
    return %arg0, %c0_i32 : i32, i32
  }
  func.func @transform_1(%arg0: i32, %arg1: i32) -> (i32, i32) {
    %c0_i32 = arith.constant 0 : i32
    %c0_i32_0 = arith.constant 0 : i32
    %c0_i32_1 = arith.constant 0 : i32
    return %c0_i32, %c0_i32_0 : i32, i32
  }
  func.func @transform_2(%arg0: i32, %arg1: i32) -> (i32, i32) {
    %c0_i32 = arith.constant 0 : i32
    %c0_i32_0 = arith.constant 0 : i32
    %c0_i32_1 = arith.constant 0 : i32
    return %c0_i32, %c0_i32_0 : i32, i32
  }
  func.func @transform_3(%arg0: i32, %arg1: i32) -> (i32, i32) {
    %c0_i32 = arith.constant 0 : i32
    %c0_i32_0 = arith.constant 0 : i32
    %c0_i32_1 = arith.constant 0 : i32
    return %c0_i32, %c0_i32_0 : i32, i32
  }
  func.func @transform_4(%arg0: i32, %arg1: i32) -> (i32, i32) {
    %c0_i32 = arith.constant 0 : i32
    %c0_i32_0 = arith.constant 0 : i32
    %c0_i32_1 = arith.constant 0 : i32
    return %c0_i32, %c0_i32_0 : i32, i32
  }
  func.func @transform_5(%arg0: i32, %arg1: i32) -> (i32, i32) {
    %c0_i32 = arith.constant 0 : i32
    %c0_i32_0 = arith.constant 0 : i32
    %c0_i32_1 = arith.constant 0 : i32
    return %c0_i32, %c0_i32_0 : i32, i32
  }
  func.func @transform_6(%arg0: i32, %arg1: i32) -> (i32, i32) {
    %c0_i32 = arith.constant 0 : i32
    %c0_i32_0 = arith.constant 0 : i32
    %c0_i32_1 = arith.constant 0 : i32
    return %c0_i32, %c0_i32_0 : i32, i32
  }
  func.func @transform_7(%arg0: i32, %arg1: i32) -> (i32, i32) {
    %c0_i32 = arith.constant 0 : i32
    %c0_i32_0 = arith.constant 0 : i32
    return %c0_i32, %arg1 : i32, i32
  }
  func.func @transform_8(%arg0: i32, %arg1: i32) -> (i32, i32) {
    %c0_i32 = arith.constant 0 : i32
    %c0_i32_0 = arith.constant 0 : i32
    return %c0_i32, %arg1 : i32, i32
  }
  func.func @transform_9(%arg0: i32, %arg1: i32) -> (i32, i32) {
    %c0_i32 = arith.constant 0 : i32
    return %arg0, %arg1 : i32, i32
  }
}

</mosaic_0001>

<llo_original>
// kernel: tpu_custom_call.1
$region0: #{tpu_custom_call.1}
  #allocation0 [shape = 'u32[]', space=smem, size = 0x4, offset = 0x4, fixed_abs, tag = 'smem constant byte address 0x4 - core index']
  #allocation1 [shape = 'u32[144,128]{1,0:T(1,128)}', space=vmem, size = 0x12000, scoped, tag = 'internal scratch']
  #allocation2 [shape = 'bf16[16,64]{1,0:T(16,128)(2,1)}', space=vmem, size = 0x1000, scoped, tag = 'scratch operand']
  %s0 = inlined_call_operand.hbm [shape: f32[16,32], index: 0, kind: input, shape index: {}]
  %s1 = inlined_call_operand.vmem [shape: f32[1,32], index: 1, kind: input, shape index: {}]
  %s2 = inlined_call_operand.vmem [shape: f32[1,32], index: 2, kind: input, shape index: {}]
  %s3 = inlined_call_operand.hbm [shape: bf16[32,64], index: 3, kind: input, shape index: {}]
  %s4 = inlined_call_operand.vmem [shape: f32[1,64], index: 4, kind: input, shape index: {}]
  %s5 = inlined_call_operand.vmem [shape: f32[1,64], index: 5, kind: input, shape index: {}]
  %s6 = inlined_call_operand.vmem [shape: f32[1,64], index: 6, kind: input, shape index: {}]
  %s7 = inlined_call_operand.hbm [shape: bf16[64,128], index: 7, kind: input, shape index: {}]
  %s8 = inlined_call_operand.vmem [shape: f32[1,128], index: 8, kind: input, shape index: {}]
  %s9 = inlined_call_operand.hbm [shape: f32[16,128], index: 9, kind: output, shape index: {}]
  %s10 = sld [smem:[#allocation0]]
  $region62: #{tpu_custom_call.1} parent=0
    _
  %s12 = ssub.s32 1, %s10
  %s13 = scalar_select 0, %s12, %s10
  $region1: #{tpu_custom_call.1} parent=0
    #allocation3 [shape = 'u8[8192]{0}', space=vmem, size = 0x2000, scoped, tag = 'input window, operand 0, single buffered']
    #allocation4 [shape = 's32[1]{0}', space=sflag, size = 0x4, scoped, tag = 'scoped memory for tpu_custom_call.1']
    #allocation5 [shape = 's32[1]{0}', space=sflag, size = 0x4, scoped, tag = 'scoped memory for tpu_custom_call.1']
    #allocation6 [shape = 'u8[8192]{0}', space=vmem, size = 0x2000, scoped, tag = 'input window, operand 3, single buffered']
    #allocation7 [shape = 's32[1]{0}', space=sflag, size = 0x4, scoped, tag = 'scoped memory for tpu_custom_call.1']
    #allocation8 [shape = 'u8[16384]{0}', space=vmem, size = 0x4000, scoped, tag = 'input window, operand 7, single buffered']
    #allocation9 [shape = 'u8[8192]{0}', space=vmem, size = 0x2000, scoped, tag = 'output window, operand 0, single buffered']
    %14 = vsyncpa [#allocation4], 0
    %15 = vsyncpa [#allocation7], 0
    %16 = vsyncpa [#allocation5], 0
    // Predicated region
    $region2: #{tpu_custom_call.1} parent=1 // pred_check
      _
    $region3: #{tpu_custom_call.1} parent=1 // pred_check_branch
      %18 = sbr.rel (0) target = $region5
    $region4: #{tpu_custom_call.1} parent=1 // pred_region
      %s20 = ssub.s32 256, 256
      %21 = vsyncadd [#allocation4], %s20
      %s22 = sshll.u32 [#allocation3], 4
      %s23 = int_to_ptr.vmem [resolvable:$true] %s22
      %28 = dma.hbm_to_vmem [thread:$0]  %s0, 256, %s23, [#allocation4], 128, 128, 8
    $region5: #{tpu_custom_call.1} parent=1 // pred_fallthru
      _
    // Predicated region
    $region6: #{tpu_custom_call.1} parent=1 // pred_check
      _
    $region7: #{tpu_custom_call.1} parent=1 // pred_check_branch
      %30 = sbr.rel (0) target = $region9
    $region8: #{tpu_custom_call.1} parent=1 // pred_region
      _
    $region9: #{tpu_custom_call.1} parent=1 // pred_fallthru
      _
    // Predicated region
    $region10: #{tpu_custom_call.1} parent=1 // pred_check
      _
    $region11: #{tpu_custom_call.1} parent=1 // pred_check_branch
      %32 = sbr.rel (0) target = $region13
    $region12: #{tpu_custom_call.1} parent=1 // pred_region
      _
    $region13: #{tpu_custom_call.1} parent=1 // pred_fallthru
      _
    // Predicated region
    $region14: #{tpu_custom_call.1} parent=1 // pred_check
      _
    $region15: #{tpu_custom_call.1} parent=1 // pred_check_branch
      %34 = sbr.rel (0) target = $region17
    $region16: #{tpu_custom_call.1} parent=1 // pred_region
      %s36 = ssub.s32 256, 256
      %37 = vsyncadd [#allocation7], %s36
      %s38 = sshll.u32 [#allocation6], 4
      %s39 = int_to_ptr.vmem [resolvable:$true] %s38
      %44 = dma.hbm_to_vmem [thread:$0]  %s3, 256, %s39, [#allocation7], 64, 64, 4
    $region17: #{tpu_custom_call.1} parent=1 // pred_fallthru
      _
    // Predicated region
    $region18: #{tpu_custom_call.1} parent=1 // pred_check
      _
    $region19: #{tpu_custom_call.1} parent=1 // pred_check_branch
      %46 = sbr.rel (0) target = $region21
    $region20: #{tpu_custom_call.1} parent=1 // pred_region
      _
    $region21: #{tpu_custom_call.1} parent=1 // pred_fallthru
      _
    // Predicated region
    $region22: #{tpu_custom_call.1} parent=1 // pred_check
      _
    $region23: #{tpu_custom_call.1} parent=1 // pred_check_branch
      %48 = sbr.rel (0) target = $region25
    $region24: #{tpu_custom_call.1} parent=1 // pred_region
      _
    $region25: #{tpu_custom_call.1} parent=1 // pred_fallthru
      _
    // Predicated region
    $region26: #{tpu_custom_call.1} parent=1 // pred_check
      _
    $region27: #{tpu_custom_call.1} parent=1 // pred_check_branch
      %50 = sbr.rel (0) target = $region29
    $region28: #{tpu_custom_call.1} parent=1 // pred_region
      _
    $region29: #{tpu_custom_call.1} parent=1 // pred_fallthru
      _
    // Predicated region
    $region30: #{tpu_custom_call.1} parent=1 // pred_check
      _
    $region31: #{tpu_custom_call.1} parent=1 // pred_check_branch
      %52 = sbr.rel (0) target = $region33
    $region32: #{tpu_custom_call.1} parent=1 // pred_region
      %s54 = ssub.s32 512, 512
      %55 = vsyncadd [#allocation7], %s54
      %s56 = sshll.u32 [#allocation8], 4
      %s57 = int_to_ptr.vmem [resolvable:$true] %s56
      %62 = dma.hbm_to_vmem [thread:$0]  %s7, 512, %s57, [#allocation7], 64, 64, 4
    $region33: #{tpu_custom_call.1} parent=1 // pred_fallthru
      _
    // Predicated region
    $region34: #{tpu_custom_call.1} parent=1 // pred_check
      _
    $region35: #{tpu_custom_call.1} parent=1 // pred_check_branch
      %64 = sbr.rel (0) target = $region37
    $region36: #{tpu_custom_call.1} parent=1 // pred_region
      _
    $region37: #{tpu_custom_call.1} parent=1 // pred_fallthru
      _
    // Predicated region
    $region38: #{tpu_custom_call.1} parent=1 // pred_check
      _
    $region39: #{tpu_custom_call.1} parent=1 // pred_check_branch
      %66 = sbr.rel (0) target = $region41
    $region40: #{tpu_custom_call.1} parent=1 // pred_region
      %67 = dma.done [#allocation4], 256
    $region41: #{tpu_custom_call.1} parent=1 // pred_fallthru
      _
    // Predicated region
    $region42: #{tpu_custom_call.1} parent=1 // pred_check
      _
    $region43: #{tpu_custom_call.1} parent=1 // pred_check_branch
      %69 = sbr.rel (0) target = $region45
    $region44: #{tpu_custom_call.1} parent=1 // pred_region
      %70 = dma.done [#allocation7], 256
    $region45: #{tpu_custom_call.1} parent=1 // pred_fallthru
      _
    // Predicated region
    $region46: #{tpu_custom_call.1} parent=1 // pred_check
      _
    $region47: #{tpu_custom_call.1} parent=1 // pred_check_branch
      %72 = sbr.rel (0) target = $region49
    $region48: #{tpu_custom_call.1} parent=1 // pred_region
      %73 = dma.done [#allocation7], 512
    $region49: #{tpu_custom_call.1} parent=1 // pred_fallthru
      _
    %p75 = scmp.eq.s32.totalorder 0, 0
    // Predicated region
    $region50: #{tpu_custom_call.1} parent=1 // pred_check
      %p76 = pneg %p75
    $region51: #{tpu_custom_call.1} parent=1 // pred_check_branch
      %78 = sbr.rel (%p76) target = $region53
    $region52: #{tpu_custom_call.1} parent=1 // pred_region
      %v79 = vld [vmem:[#allocation3] sm:$0xff]
      %v80 = vld [vmem:[#allocation3 + $0x8] sm:$0xff]
      %v81 = vld [vmem:[%s1] sm:$0x1]
      %v82 = vld [vmem:[%s2] sm:$0x1]
      %vm83 = vcmask 261120
      %v84 = vsel %vm83, %v79, 0.0
      %85 = vadd.xlane.f32.xlu0 %v84
      %v86 = vpop.xlane.xlu0 %85
      %v87 = vsel %vm83, %v80, 0.0
      %88 = vadd.xlane.f32.xlu0 %v87
      %v89 = vpop.xlane.xlu0 %88
      %v90 = vrcp.pop 32.0
      %v91 = vmul.f32 %v86, %v90
      %v92 = vmul.f32 %v89, %v90
      %v93 = vsub.f32 %v79, %v91
      %v94 = vsub.f32 %v80, %v92
      %v95 = vmul.f32 %v93, %v93
      %v96 = vmul.f32 %v94, %v94
      %v97 = vsel %vm83, %v95, 0.0
      %98 = vadd.xlane.f32.xlu0 %v97
      %v99 = vpop.xlane.xlu0 %98
      %v100 = vsel %vm83, %v96, 0.0
      %101 = vadd.xlane.f32.xlu0 %v100
      %v102 = vpop.xlane.xlu0 %101
      %v103 = vmul.f32 %v99, %v90
      %v104 = vmul.f32 %v102, %v90
      %v105 = vadd.f32 %v103, 1e-05
      %v106 = vadd.f32 %v104, 1e-05
      %v107 = vrsqrt.pop %v105
      %v108 = vrsqrt.pop %v106
      %v109 = vmul.f32 %v93, %v107
      %v110 = vmul.f32 %v94, %v108
      %v112 = vlaneseq
      %v113 = vshrl.u32 %v112, 7
      %v114 = vsub.s32 0, %v113
      %v115 = vrot.slane %v81, %v114
      %v117 = vmul.f32 %v109, %v115
      %v118 = vmul.f32 %v110, %v115
      %v120 = vlaneseq
      %v121 = vshrl.u32 %v120, 7
      %v122 = vsub.s32 0, %v121
      %v123 = vrot.slane %v82, %v122
      %v125 = vadd.f32 %v117, %v123
      %v126 = vadd.f32 %v118, %v123
      %v127 = vpack.c.bf16 %v126, %v125
      %v128 = vld [vmem:[#allocation6] sm:$0xf]
      %v129 = vld [vmem:[#allocation6 + $0x4] sm:$0xf]
      %v130 = vld [vmem:[#allocation6 + $0x8] sm:$0xf]
      %v131 = vld [vmem:[#allocation6 + $0xc] sm:$0xf]
      %v132 = vld [vmem:[%s4] sm:$0x1]
      %v134 = vlaneseq
      %v135 = vshrl.u32 %v134, 7
      %v136 = vsub.s32 0, %v135
      %v137 = vrot.slane %v132, %v136
      %v143 = vunpack.c.l.b16 %v128
      %v144 = vunpack.c.l.b16 %v129
      %v145 = vunpack.c.l.b16 %v130
      %v146 = vunpack.c.l.b16 %v131
      %v147 = vpack.c.b16 %v144, %v143
      %v148 = vpack.c.b16 %v146, %v145
      %v152 = vsel %vm83, %v127, 0
      %154 = vmatprep.subr.bf16.mxu0 0
      %155 = vmatpush1.bf16.msra.mxu0 %v147
      %156 = vmatprep.subr.bf16.mxu0 0
      %157 = vmatpush1.bf16.msra.mxu0 %v148
      %158 = vmatprep.subr.bf16.mxu0 0
      %159 = vmatpush1.bf16.msra.mxu0 0
      %160 = vmatprep.subr.bf16.mxu0 0
      %161 = vmatpush1.bf16.msra.mxu0 0
      %162 = vmatprep.subr.bf16.mxu0 0
      %163 = vmatpush1.bf16.msra.mxu0 0
      %164 = vmatprep.subr.bf16.mxu0 0
      %165 = vmatpush1.bf16.msra.mxu0 0
      %166 = vmatprep.subr.bf16.mxu0 0
      %167 = vmatpush1.bf16.msra.mxu0 0
      %168 = vmatprep.subr.bf16.mxu0 0
      %169 = vmatpush1.bf16.msra.mxu0 0
      %170 = vmatprep.subr.bf16.mxu0 0
      %171 = vmatpush1.bf16.msra.mxu0 0
      %172 = vmatprep.subr.bf16.mxu0 0
      %173 = vmatpush1.bf16.msra.mxu0 0
      %174 = vmatprep.subr.bf16.mxu0 0
      %175 = vmatpush1.bf16.msra.mxu0 0
      %176 = vmatprep.subr.bf16.mxu0 0
      %177 = vmatpush1.bf16.msra.mxu0 0
      %178 = vmatprep.subr.bf16.mxu0 0
      %179 = vmatpush1.bf16.msra.mxu0 0
      %180 = vmatprep.subr.bf16.mxu0 0
      %181 = vmatpush1.bf16.msra.mxu0 0
      %182 = vmatprep.subr.bf16.mxu0 0
      %183 = vmatpush1.bf16.msra.mxu0 0
      %184 = vmatprep.subr.bf16.mxu0 0
      %185 = vmatpush1.bf16.msra.mxu0 0
      %186 = vmatprep.mubr.bf16.mxu0 0
      %187 = vmatmul.mubr.bf16.gmra.mrb[0].mxu0 %v152
      %v188 = vpop.f32.mrb[0].mxu0
      %v189 = vadd.f32 %v137, %v188
      %v190 = vpop.f32.mrb[0].mxu0
      %v191 = vpop.f32.mrb[0].mxu0
      %v192 = vadd.f32 %v137, %v191
      %v193 = vpop.f32.mrb[0].mxu0
      %194 = vdwg.mxu0
      %v195 = vld [vmem:[%s5] sm:$0x1]
      %v196 = vld [vmem:[%s6] sm:$0x1]
      %vm197 = vcmask 523264
      %v198 = vsel %vm197, %v189, 0.0
      %199 = vadd.xlane.f32.xlu0 %v198
      %v200 = vpop.xlane.xlu0 %199
      %v201 = vsel %vm197, %v192, 0.0
      %202 = vadd.xlane.f32.xlu0 %v201
      %v203 = vpop.xlane.xlu0 %202
      %v204 = vrcp.pop 64.0
      %v205 = vmul.f32 %v200, %v204
      %v206 = vmul.f32 %v203, %v204
      %v207 = vsub.f32 %v189, %v205
      %v208 = vsub.f32 %v192, %v206
      %v209 = vmul.f32 %v207, %v207
      %v210 = vmul.f32 %v208, %v208
      %v211 = vsel %vm197, %v209, 0.0
      %212 = vadd.xlane.f32.xlu0 %v211
      %v213 = vpop.xlane.xlu0 %212
      %v214 = vsel %vm197, %v210, 0.0
      %215 = vadd.xlane.f32.xlu0 %v214
      %v216 = vpop.xlane.xlu0 %215
      %v217 = vmul.f32 %v213, %v204
      %v218 = vmul.f32 %v216, %v204
      %v219 = vadd.f32 %v217, 1e-05
      %v220 = vadd.f32 %v218, 1e-05
      %v221 = vrsqrt.pop %v219
      %v222 = vrsqrt.pop %v220
      %v223 = vmul.f32 %v207, %v221
      %v224 = vmul.f32 %v208, %v222
      %v226 = vlaneseq
      %v227 = vshrl.u32 %v226, 7
      %v228 = vsub.s32 0, %v227
      %v229 = vrot.slane %v195, %v228
      %v231 = vmul.f32 %v223, %v229
      %v232 = vmul.f32 %v224, %v229
      %v234 = vlaneseq
      %v235 = vshrl.u32 %v234, 7
      %v236 = vsub.s32 0, %v235
      %v237 = vrot.slane %v196, %v236
      %v239 = vadd.f32 %v231, %v237
      %v240 = vadd.f32 %v232, %v237
      %v241 = vmul.f32 %v239, 0.5
      %v242 = vmul.f32 %v240, 0.5
      %v243 = vmul.f32 %v239, 0.70710677
      %v244 = vmul.f32 %v240, 0.70710677
      %v245 = verf.f32.pop %v243
      %v246 = verf.f32.pop %v244
      %v247 = vadd.f32 %v245, 1.0
      %v248 = vadd.f32 %v246, 1.0
      %v249 = vmul.f32 %v241, %v247
      %v250 = vmul.f32 %v242, %v248
      %v251 = vpack.c.bf16 %v250, %v249
      %252 = vst.msk [vmem:[#allocation2] sm:$0xff] %vm197, %v251
    $region53: #{tpu_custom_call.1} parent=1 // pred_fallthru
      _
    %v253 = vld [vmem:[#allocation2] sm:$0xff]
    %v254 = vld [vmem:[#allocation8] sm:$0xf]
    %v255 = vld [vmem:[#allocation8 + $0x4] sm:$0xf]
    %v256 = vld [vmem:[#allocation8 + $0x8] sm:$0xf]
    %v257 = vld [vmem:[#allocation8 + $0xc] sm:$0xf]
    %v258 = vld [vmem:[#allocation8 + $0x10] sm:$0xf]
    %v259 = vld [vmem:[#allocation8 + $0x14] sm:$0xf]
    %v260 = vld [vmem:[#allocation8 + $0x18] sm:$0xf]
    %v261 = vld [vmem:[#allocation8 + $0x1c] sm:$0xf]
    %v262 = vld [vmem:[%s8] sm:$0x1]
    %v264 = vlaneseq
    %v265 = vshrl.u32 %v264, 7
    %v266 = vsub.s32 0, %v265
    %v267 = vrot.slane %v262, %v266
    %v277 = vunpack.c.l.b16 %v254
    %v278 = vunpack.c.l.b16 %v255
    %v279 = vunpack.c.l.b16 %v256
    %v280 = vunpack.c.l.b16 %v257
    %v281 = vunpack.c.l.b16 %v258
    %v282 = vunpack.c.l.b16 %v259
    %v283 = vunpack.c.l.b16 %v260
    %v284 = vunpack.c.l.b16 %v261
    %v285 = vpack.c.b16 %v278, %v277
    %v286 = vpack.c.b16 %v280, %v279
    %v287 = vpack.c.b16 %v282, %v281
    %v288 = vpack.c.b16 %v284, %v283
    %vm293 = vcmask 523264
    %v295 = vsel %vm293, %v253, 0
    %297 = vmatprep.subr.bf16.mxu0 0
    %298 = vmatpush1.bf16.msra.mxu0 %v285
    %299 = vmatprep.subr.bf16.mxu0 0
    %300 = vmatpush1.bf16.msra.mxu0 %v286
    %301 = vmatprep.subr.bf16.mxu0 0
    %302 = vmatpush1.bf16.msra.mxu0 %v287
    %303 = vmatprep.subr.bf16.mxu0 0
    %304 = vmatpush1.bf16.msra.mxu0 %v288
    %305 = vmatprep.subr.bf16.mxu0 0
    %306 = vmatpush1.bf16.msra.mxu0 0
    %307 = vmatprep.subr.bf16.mxu0 0
    %308 = vmatpush1.bf16.msra.mxu0 0
    %309 = vmatprep.subr.bf16.mxu0 0
    %310 = vmatpush1.bf16.msra.mxu0 0
    %311 = vmatprep.subr.bf16.mxu0 0
    %312 = vmatpush1.bf16.msra.mxu0 0
    %313 = vmatprep.subr.bf16.mxu0 0
    %314 = vmatpush1.bf16.msra.mxu0 0
    %315 = vmatprep.subr.bf16.mxu0 0
    %316 = vmatpush1.bf16.msra.mxu0 0
    %317 = vmatprep.subr.bf16.mxu0 0
    %318 = vmatpush1.bf16.msra.mxu0 0
    %319 = vmatprep.subr.bf16.mxu0 0
    %320 = vmatpush1.bf16.msra.mxu0 0
    %321 = vmatprep.subr.bf16.mxu0 0
    %322 = vmatpush1.bf16.msra.mxu0 0
    %323 = vmatprep.subr.bf16.mxu0 0
    %324 = vmatpush1.bf16.msra.mxu0 0
    %325 = vmatprep.subr.bf16.mxu0 0
    %326 = vmatpush1.bf16.msra.mxu0 0
    %327 = vmatprep.subr.bf16.mxu0 0
    %328 = vmatpush1.bf16.msra.mxu0 0
    %329 = vmatprep.mubr.bf16.mxu0 0
    %330 = vmatmul.mubr.bf16.gmra.mrb[0].mxu0 %v295
    %v331 = vpop.f32.mrb[0].mxu0
    %v332 = vadd.f32 %v267, %v331
    %v333 = vpop.f32.mrb[0].mxu0
    %v334 = vpop.f32.mrb[0].mxu0
    %v335 = vadd.f32 %v267, %v334
    %v336 = vpop.f32.mrb[0].mxu0
    %337 = vdwg.mxu0
    %338 = vst [vmem:[#allocation9] sm:$0xff] %v332
    %339 = vst [vmem:[#allocation9 + $0x8] sm:$0xff] %v335
    // Predicated region
    $region54: #{tpu_custom_call.1} parent=1 // pred_check
      _
    $region55: #{tpu_custom_call.1} parent=1 // pred_check_branch
      %341 = sbr.rel (0) target = $region57
    $region56: #{tpu_custom_call.1} parent=1 // pred_region
      %s343 = ssub.s32 256, 256
      %344 = vsyncadd [#allocation5], %s343
      %s345 = sshll.u32 [#allocation9], 4
      %s346 = int_to_ptr.vmem [resolvable:$true] %s345
      %351 = dma.vmem_to_hbm [thread:$0]  %s346, 256, %s9, [#allocation5], 128, 128, 8
    $region57: #{tpu_custom_call.1} parent=1 // pred_fallthru
      _
    // Predicated region
    $region58: #{tpu_custom_call.1} parent=1 // pred_check
      _
    $region59: #{tpu_custom_call.1} parent=1 // pred_check_branch
      %353 = sbr.rel (0) target = $region61
    $region60: #{tpu_custom_call.1} parent=1 // pred_region
      %354 = dma.done [#allocation5], 256
    $region61: #{tpu_custom_call.1} parent=1 // pred_fallthru
      _
    %355 = vsyncpa [#allocation4], 1
    %356 = vsyncpa [#allocation7], 1
    %357 = vsyncpa [#allocation5], 1

</llo_original>
